<compile_context>
chip_gen: v7x
topology: tpu7x:2x2x1
jax: 0.10.0
libtpu: 0.0.40
codegen_flags: <defaults>
</compile_context>

<pallas_src>
import math

import numpy as np
import jax
import jax.numpy as jnp
from jax.experimental import pallas as pl
from jax.experimental.pallas import tpu as pltpu


# ---------------------------------------------------------------------------
# Kernel
# ---------------------------------------------------------------------------
def _timestep_embedder_kernel(t_ref, freqs_ref, w1_ref, b1_ref,
                              w2_ref, b2_ref, o_ref):
    # t_ref:     (N, 1)          f32      (resident)
    # freqs_ref: (1, half)       f32      (resident)
    # w1_ref:    (2*half, H)     weight dtype (resident)
    # b1_ref:    (1, H)          f32      (resident)
    # w2_ref:    (H, TILE_N)     weight dtype (streamed column tile)
    # b2_ref:    (1, TILE_N)     f32      (streamed column tile)
    # o_ref:     (N, TILE_N)     output dtype
    t = t_ref[...]                                   # (N, 1)
    freqs = freqs_ref[...]                           # (1, half)
    args = t * freqs                                 # (N, half) f32

    wdt = w1_ref.dtype
    # Sinusoidal embedding; single K = 2*half matmul (fills the MXU K dim).
    emb = jnp.concatenate([jnp.cos(args), jnp.sin(args)], axis=-1).astype(wdt)

    h = jnp.dot(emb, w1_ref[...], preferred_element_type=jnp.float32)
    h = h + b1_ref[...].astype(jnp.float32)

    # SiLU in f32 (sigmoid lowers to the EUP).
    h = h * jax.nn.sigmoid(h)

    # Second Linear against this grid step's W2 column tile.
    out = jnp.dot(h.astype(w2_ref.dtype), w2_ref[...],
                  preferred_element_type=jnp.float32)
    out = out + b2_ref[...].astype(jnp.float32)

    o_ref[...] = out.astype(o_ref.dtype)


# ---------------------------------------------------------------------------
# Wrapper helpers
# ---------------------------------------------------------------------------
_FREQS_CACHE = {}


def _get_freqs(half, max_period):
    """Hoisted / cached sinusoidal frequencies (computed once per (half, T))."""
    key = (int(half), int(max_period))
    if key not in _FREQS_CACHE:
        f = np.exp(-math.log(max_period)
                   * np.arange(half, dtype=np.float32) / half)
        _FREQS_CACHE[key] = jnp.asarray(f, dtype=jnp.float32)
    return _FREQS_CACHE[key]


def _vmem_cap_bytes():
    """Generation-aware VMEM budget: ~75% of physical VMEM."""
    cap = 128 << 20
    try:
        info = pltpu.get_tpu_info()
        cap = int(getattr(info, "vmem_capacity_bytes", cap) or cap)
    except Exception:
        pass
    return (cap * 3) // 4          # ~48 MiB on v7x (64 MiB), ~96 MiB on v5e/v6e


def _pick_tile_n(hidden, fits):
    """Pick a W2 column-tile width.

    Preference order: even grid of 2 (balanced across v7x's two TCs), then 4,
    then a single resident tile (grid=1), then progressively smaller
    128-aligned tiles.  `fits(tile)` is a VMEM-budget predicate.
    """
    candidates = []
    for g in (2, 4):
        if hidden % (128 * g) == 0:
            candidates.append(hidden // g)
    candidates.append(hidden)                     # grid = 1 (full extent)
    for g in (6, 8, 3, 12, 16, 24):
        if hidden % (128 * g) == 0:
            candidates.append(hidden // g)
    if hidden % 128 == 0:
        candidates.append(128)
    for tile in candidates:
        if fits(tile):
            return tile
    return candidates[-1]


# ---------------------------------------------------------------------------
# Wrapper
# ---------------------------------------------------------------------------
def timestep_embedder(t, w1, b1, w2, b2, *, frequency_embedding_size=256,
                      max_period=10000, dtype=jnp.float32,
                      weight_dtype=jnp.bfloat16, tile_n=None):
    """Pallas implementation of TimestepEmbedder.forward.

    t  : (N,) float — scalar timesteps (may be fractional)
    w1 : (F, H)  b1 : (H,)   first Linear (weights transposed vs torch .weight)
    w2 : (H, H)  b2 : (H,)   second Linear
    Weights are cast to `weight_dtype` (bf16 by default — the production,
    bandwidth-optimal path); accumulation is always f32.
    """
    n = t.shape[0]
    dim = frequency_embedding_size
    half = dim // 2
    hidden = w1.shape[1]

    # Enforced production weight dtype (bf16 by default).
    w1 = w1[:2 * half].astype(weight_dtype)     # drop odd-dim zero-pad row
    w2 = w2.astype(weight_dtype)
    b1_2 = b1.reshape(1, hidden).astype(jnp.float32)
    b2_2 = b2.reshape(1, hidden).astype(jnp.float32)

    freqs2 = _get_freqs(half, max_period).reshape(1, half)
    t2 = t.astype(jnp.float32).reshape(n, 1)

    w_itemsize = jnp.dtype(weight_dtype).itemsize
    out_itemsize = jnp.dtype(dtype).itemsize

    # Rough VMEM accounting (Pallas double-buffers every input block).
    resident_bytes = (2 * half * hidden * w_itemsize     # W1
                      + hidden * 4                       # b1
                      + (64 << 10))                      # t/freqs + padding slack
    budget = _vmem_cap_bytes()

    def _fits(tile):
        tile_bytes = (hidden * tile * w_itemsize
                      + tile * 4
                      + n * tile * out_itemsize)
        return 2 * (resident_bytes + tile_bytes) + (4 << 20) <= budget

    if tile_n is None:
        tile_n = _pick_tile_n(hidden, _fits)
    assert hidden % tile_n == 0, (hidden, tile_n)
    grid = (hidden // tile_n,)

    # Advisory cost estimate so XLA can overlap this small call.
    flops = 2 * n * (2 * half) * hidden + 2 * n * hidden * hidden
    transcendentals = n * (2 * half + hidden)             # cos, sin, sigmoid
    bytes_accessed = (2 * half * hidden * w_itemsize
                      + hidden * hidden * w_itemsize
                      + 2 * hidden * 4
                      + n * 4
                      + n * hidden * out_itemsize)
    cost = pl.CostEstimate(flops=int(flops),
                           transcendentals=int(transcendentals),
                           bytes_accessed=int(bytes_accessed))

    tile_bytes = (hidden * tile_n * w_itemsize + tile_n * 4
                  + n * tile_n * out_itemsize)
    vmem_bytes = int(2 * (resident_bytes + tile_bytes) + (4 << 20))
    vmem_bytes = min(max(vmem_bytes, min(32 << 20, budget)), budget)

    out = pl.pallas_call(
        _timestep_embedder_kernel,
        out_shape=jax.ShapeDtypeStruct((n, hidden), dtype),
        grid_spec=pltpu.PrefetchScalarGridSpec(
            num_scalar_prefetch=0,
            grid=grid,
            in_specs=[
                pl.BlockSpec((n, 1), lambda j: (0, 0)),             # t
                pl.BlockSpec((1, half), lambda j: (0, 0)),          # freqs
                pl.BlockSpec((2 * half, hidden), lambda j: (0, 0)), # W1
                pl.BlockSpec((1, hidden), lambda j: (0, 0)),        # b1
                pl.BlockSpec((hidden, tile_n), lambda j: (0, j)),   # W2 col tile
                pl.BlockSpec((1, tile_n), lambda j: (0, j)),        # b2 col tile
            ],
            out_specs=pl.BlockSpec((n, tile_n), lambda j: (0, j)),
        ),
        compiler_params=pltpu.CompilerParams(
            dimension_semantics=("parallel",),
            vmem_limit_bytes=vmem_bytes,
        ),
        cost_estimate=cost,
    )(t2, freqs2, w1, b1_2, w2, b2_2)
    return out


# ---------------------------------------------------------------------------
# Pure-JAX reference (mirrors the PyTorch module)
# ---------------------------------------------------------------------------
def _reference(t, w1, b1, w2, b2, frequency_embedding_size=256,
               max_period=10000):
    half = frequency_embedding_size // 2
    freqs = jnp.exp(
        -math.log(max_period) * jnp.arange(half, dtype=jnp.float32) / half)
    args = t.astype(jnp.float32)[:, None] * freqs[None]
    emb = jnp.concatenate([jnp.cos(args), jnp.sin(args)], axis=-1)
    h = emb @ w1.astype(jnp.float32) + b1.astype(jnp.float32)
    h = h * jax.nn.sigmoid(h)
    return h @ w2.astype(jnp.float32) + b2.astype(jnp.float32)


if __name__ == "__main__":
    key = jax.random.PRNGKey(0)
    k_t, k_w1, k_b1, k_w2, k_b2 = jax.random.split(key, 5)

    N = 8                       # batch of timesteps
    F = 256                     # frequency_embedding_size
    H = 256                     # hidden_size (multiple of 256 -> grid=(2,)
                                # exercises the column-tiled path)

    t = jax.random.uniform(k_t, (N,), jnp.float32, 0.0, 1000.0)
    w1 = jax.random.normal(k_w1, (F, H), jnp.float32) * 0.02
    b1 = jax.random.normal(k_b1, (H,), jnp.float32) * 0.02
    w2 = jax.random.normal(k_w2, (H, H), jnp.float32) * 0.02
    b2 = jax.random.normal(k_b2, (H,), jnp.float32) * 0.02

    ref = _reference(t, w1, b1, w2, b2, frequency_embedding_size=F)

    # f32-weight override (tight accuracy check of the kernel structure).
    out_f32 = timestep_embedder(t, w1, b1, w2, b2,
                                frequency_embedding_size=F,
                                weight_dtype=jnp.float32)
    out_f32 = jax.block_until_ready(out_f32)
    assert out_f32.shape == (N, H) and out_f32.dtype == jnp.float32
    assert jnp.allclose(out_f32, ref, atol=1e-4, rtol=1e-4), (
        f"f32 max abs err {jnp.max(jnp.abs(out_f32 - ref))}")

    # Default production path: bf16 weights, f32 accumulation inside.
    out_bf = timestep_embedder(t, w1, b1, w2, b2,
                               frequency_embedding_size=F)
    out_bf = jax.block_until_ready(out_bf)
    assert out_bf.shape == (N, H) and out_bf.dtype == jnp.float32
    assert jnp.allclose(out_bf, ref, atol=3e-2, rtol=3e-2), (
        f"bf16 max abs err {jnp.max(jnp.abs(out_bf - ref))}")

    print("KERNEL_OK")
</pallas_src>

<mosaic_0001>
module attributes {stable_mosaic.version = 11 : i64} {
  func.func @_timestep_embedder_kernel(%arg0: i32, %arg1: memref<8x1xf32, #tpu.memory_space<vmem>>, %arg2: memref<1x128xf32, #tpu.memory_space<vmem>>, %arg3: memref<256x256xf32, #tpu.memory_space<vmem>>, %arg4: memref<1x256xf32, #tpu.memory_space<vmem>>, %arg5: memref<256x128xf32, #tpu.memory_space<vmem>>, %arg6: memref<1x128xf32, #tpu.memory_space<vmem>>, %arg7: memref<8x128xf32, #tpu.memory_space<vmem>>) attributes {dimension_semantics = [#tpu.dimension_semantics<parallel>], iteration_bounds = array<i64: 2>, scalar_prefetch = 0 : i64, scratch_operands = 0 : i64, tpu.core_type = #tpu.core_type<tc>, window_params = [{pipeline_mode = #tpu.pipeline_mode<synchronous>, transform_indices = @transform_0, window_bounds = array<i64: 8, 1>}, {pipeline_mode = #tpu.pipeline_mode<synchronous>, transform_indices = @transform_1, window_bounds = array<i64: 1, 128>}, {pipeline_mode = #tpu.pipeline_mode<synchronous>, transform_indices = @transform_2, window_bounds = array<i64: 256, 256>}, {pipeline_mode = #tpu.pipeline_mode<synchronous>, transform_indices = @transform_3, window_bounds = array<i64: 1, 256>}, {transform_indices = @transform_4, window_bounds = array<i64: 256, 128>}, {transform_indices = @transform_5, window_bounds = array<i64: 1, 128>}, {transform_indices = @transform_6, window_bounds = array<i64: 8, 128>}]} {
    %c0 = arith.constant 0 : index
    %c0_0 = arith.constant 0 : index
    %0 = vector.load %arg1[%c0, %c0_0] : memref<8x1xf32, #tpu.memory_space<vmem>>, vector<8x1xf32>
    %c0_1 = arith.constant 0 : index
    %c0_2 = arith.constant 0 : index
    %1 = vector.load %arg2[%c0_1, %c0_2] : memref<1x128xf32, #tpu.memory_space<vmem>>, vector<1x128xf32>
    %2 = vector.broadcast %0 : vector<8x1xf32> to vector<8x128xf32>
    %3 = vector.broadcast %1 : vector<1x128xf32> to vector<8x128xf32>
    %4 = arith.mulf %2, %3 : vector<8x128xf32>
    %5 = math.cos %4 : vector<8x128xf32>
    %6 = math.sin %4 : vector<8x128xf32>
    %7 = tpu.concatenate %5, %6 in 1 : vector<8x128xf32>, vector<8x128xf32> -> vector<8x256xf32>
    %c0_3 = arith.constant 0 : index
    %c0_4 = arith.constant 0 : index
    %8 = vector.load %arg3[%c0_3, %c0_4] : memref<256x256xf32, #tpu.memory_space<vmem>>, vector<256x256xf32>
    %cst = arith.constant dense<0.000000e+00> : vector<8x256xf32>
    %9 = tpu.matmul %7, %8, %cst {dimension_numbers = #tpu.dot_dimension_numbers<[1], [0], [0], [1], [0, 0, 1, 1], [], []>} : vector<8x256xf32>, vector<256x256xf32>, vector<8x256xf32> -> vector<8x256xf32>
    %c0_5 = arith.constant 0 : index
    %c0_6 = arith.constant 0 : index
    %10 = vector.load %arg4[%c0_5, %c0_6] : memref<1x256xf32, #tpu.memory_space<vmem>>, vector<1x256xf32>
    %11 = vector.broadcast %10 : vector<1x256xf32> to vector<8x256xf32>
    %12 = arith.addf %9, %11 : vector<8x256xf32>
    %13 = arith.negf %12 : vector<8x256xf32>
    %14 = math.exp %13 : vector<8x256xf32>
    %cst_7 = arith.constant 1.000000e+00 : f32
    %15 = vector.broadcast %cst_7 : f32 to vector<8x256xf32>
    %16 = arith.addf %15, %14 : vector<8x256xf32>
    %17 = arith.divf %15, %16 : vector<8x256xf32>
    %18 = arith.mulf %12, %17 : vector<8x256xf32>
    %c0_8 = arith.constant 0 : index
    %c0_9 = arith.constant 0 : index
    %19 = vector.load %arg5[%c0_8, %c0_9] : memref<256x128xf32, #tpu.memory_space<vmem>>, vector<256x128xf32>
    %cst_10 = arith.constant dense<0.000000e+00> : vector<8x128xf32>
    %20 = tpu.matmul %18, %19, %cst_10 {dimension_numbers = #tpu.dot_dimension_numbers<[1], [0], [0], [1], [0, 0, 1, 1], [], []>} : vector<8x256xf32>, vector<256x128xf32>, vector<8x128xf32> -> vector<8x128xf32>
    %c0_11 = arith.constant 0 : index
    %c0_12 = arith.constant 0 : index
    %21 = vector.load %arg6[%c0_11, %c0_12] : memref<1x128xf32, #tpu.memory_space<vmem>>, vector<1x128xf32>
    %22 = vector.broadcast %21 : vector<1x128xf32> to vector<8x128xf32>
    %23 = arith.addf %20, %22 : vector<8x128xf32>
    %c0_13 = arith.constant 0 : index
    %c0_14 = arith.constant 0 : index
    %24 = vector.load %arg7[%c0_13, %c0_14] : memref<8x128xf32, #tpu.memory_space<vmem>>, vector<8x128xf32>
    tpu.vector_store %arg7[%c0_13, %c0_14], %23 {strides = array<i32>} : memref<8x128xf32, #tpu.memory_space<vmem>>, vector<8x128xf32>,
    return
  }
  func.func @transform_0(%arg0: i32) -> (i32, i32) {
    %c0_i32 = arith.constant 0 : i32
    %c0_i32_0 = arith.constant 0 : i32
    %c0_i32_1 = arith.constant 0 : i32
    return %c0_i32, %c0_i32_0 : i32, i32
  }
  func.func @transform_1(%arg0: i32) -> (i32, i32) {
    %c0_i32 = arith.constant 0 : i32
    %c0_i32_0 = arith.constant 0 : i32
    %c0_i32_1 = arith.constant 0 : i32
    return %c0_i32, %c0_i32_0 : i32, i32
  }
  func.func @transform_2(%arg0: i32) -> (i32, i32) {
    %c0_i32 = arith.constant 0 : i32
    %c0_i32_0 = arith.constant 0 : i32
    %c0_i32_1 = arith.constant 0 : i32
    return %c0_i32, %c0_i32_0 : i32, i32
  }
  func.func @transform_3(%arg0: i32) -> (i32, i32) {
    %c0_i32 = arith.constant 0 : i32
    %c0_i32_0 = arith.constant 0 : i32
    %c0_i32_1 = arith.constant 0 : i32
    return %c0_i32, %c0_i32_0 : i32, i32
  }
  func.func @transform_4(%arg0: i32) -> (i32, i32) {
    %c0_i32 = arith.constant 0 : i32
    %c0_i32_0 = arith.constant 0 : i32
    return %c0_i32, %arg0 : i32, i32
  }
  func.func @transform_5(%arg0: i32) -> (i32, i32) {
    %c0_i32 = arith.constant 0 : i32
    %c0_i32_0 = arith.constant 0 : i32
    return %c0_i32, %arg0 : i32, i32
  }
  func.func @transform_6(%arg0: i32) -> (i32, i32) {
    %c0_i32 = arith.constant 0 : i32
    %c0_i32_0 = arith.constant 0 : i32
    return %c0_i32, %arg0 : i32, i32
  }
}

</mosaic_0001>

<llo_original>
// kernel: tpu_custom_call.1
$region0: #{tpu_custom_call.1}
  #allocation0 [shape = 'u32[]', space=smem, size = 0x4, offset = 0x4, fixed_abs, tag = 'smem constant byte address 0x4 - core index']
  #allocation1 [shape = 'u32[144,128]{1,0:T(1,128)}', space=vmem, size = 0x12000, scoped, tag = 'internal scratch']
  %s0 = inlined_call_operand.vmem [shape: f32[8,1], index: 0, kind: input, shape index: {}]
  %s1 = inlined_call_operand.vmem [shape: f32[1,128], index: 1, kind: input, shape index: {}]
  %s2 = inlined_call_operand.hbm [shape: f32[256,256], index: 2, kind: input, shape index: {}]
  %s3 = inlined_call_operand.vmem [shape: f32[1,256], index: 3, kind: input, shape index: {}]
  %s4 = inlined_call_operand.hbm [shape: f32[256,256], index: 4, kind: input, shape index: {}]
  %s5 = inlined_call_operand.vmem [shape: f32[1,256], index: 5, kind: input, shape index: {}]
  %s6 = inlined_call_operand.hbm [shape: f32[8,256], index: 6, kind: output, shape index: {}]
  %s7 = sld [smem:[#allocation0]]
  $region65: #{tpu_custom_call.1} parent=0
    _
  %s9 = ssub.s32 1, %s7
  %s10 = scalar_select 0, %s9, %s7
  $region1: #{tpu_custom_call.1} parent=0
    #allocation2 [shape = 'u8[262144]{0}', space=vmem, size = 0x40000, scoped, tag = 'input window, operand 2, single buffered']
    #allocation3 [shape = 's32[2]{0}', space=sflag, size = 0x8, scoped, tag = 'scoped memory for tpu_custom_call.1']
    #allocation4 [shape = 's32[2]{0}', space=sflag, size = 0x8, scoped, tag = 'scoped memory for tpu_custom_call.1']
    #allocation5 [shape = 'u8[262144]{0}', space=vmem, size = 0x40000, scoped, tag = 'input window, operand 4']
    #allocation6 [shape = 's32[2]{0}', space=sflag, size = 0x8, scoped, tag = 'scoped memory for tpu_custom_call.1']
    #allocation7 [shape = 'u8[8192]{0}', space=vmem, size = 0x2000, scoped, tag = 'output window, operand 0']
    %11 = vsyncpa [#allocation3], 0
    %12 = vsyncpa [#allocation6], 0
    %s13 = scalar_lea.sflag [#allocation6], 1
    %14 = vsyncpa %s13, 0
    %15 = vsyncpa [#allocation4], 0
    %s16 = scalar_lea.sflag [#allocation4], 1
    %17 = vsyncpa %s16, 0
    loop: start=0, step=1, limit=4
    $region2: #{tpu_custom_call.1} parent=1 // loop_pre_header
      _
    $region3: #{tpu_custom_call.1} parent=1 // loop_header
      %s19 = sphi 0, %s23
      %p20 = scmp.ge.s32.totalorder %s19, 4
      %s27 = sphi 0, %s27
      %s29 = sphi 0, %s27
      %s30 = sphi 0, %s29
      %s44 = sphi 0, %s30
      %s48 = sphi 0, %s48
      %s50 = sphi 0, %s48
      %s51 = sphi 0, %s50
      %s65 = sphi 0, %s51
      %s69 = sphi 0, %s69
      %s71 = sphi 0, %s69
      %s72 = sphi 0, %s71
      %s86 = sphi 0, %s72
      %s90 = sphi 0, %s90
      %s92 = sphi 0, %s90
      %s93 = sphi 0, %s92
      %s107 = sphi 0, %s93
      %s113 = sphi 0, %s115
      %s116 = sphi 0, %s113
      %s117 = sphi 0, %s116
      %s133 = sphi 0, %s117
      %s139 = sphi 0, %s141
      %s142 = sphi 0, %s139
      %s143 = sphi 0, %s142
      %s159 = sphi 0, %s143
      %s165 = sphi 0, %s167
      %s168 = sphi 0, %s165
      %s169 = sphi 0, %s168
      %s185 = sphi 0, %s169
    $region4: #{tpu_custom_call.1} parent=1 // loop_header_branch
      %22 = sbr.rel (%p20) target = $region8
    $region5: #{tpu_custom_call.1} parent=1 // loop_body
      %s24 = ssub.s32 %s19, 1
      %s25 = ssub.s32 %s19, 2
      %s26 = sadd.s32 %s19, 1
      %s28 = sadd.s32 %s27, 1
      %p31 = scmp.eq.s32.totalorder %s19, 1
      %p32 = scmp.ne.s32.totalorder %s27, %s29
      %p33 = scmp.eq.s32.totalorder %s19, 0
      %p34 = por %p32, %p33
      %p35 = scmp.ne.s32.totalorder %s27, %s29
      %p36 = scmp.eq.s32.totalorder %s24, 1
      %p37 = por %p35, %p36
      %p38 = scmp.ne.s32.totalorder %s29, %s30
      %p39 = scmp.eq.s32.totalorder %s24, 0
      %p40 = por %p38, %p39
      %p41 = scmp.ne.s32.totalorder %s29, %s30
      %p42 = scmp.eq.s32.totalorder %s25, 1
      %p43 = por %p41, %p42
      %p45 = scmp.ne.s32.totalorder %s30, %s44
      %p46 = scmp.eq.s32.totalorder %s25, 0
      %p47 = por %p45, %p46
      %s49 = sadd.s32 %s48, 1
      %p52 = scmp.eq.s32.totalorder %s19, 1
      %p53 = scmp.ne.s32.totalorder %s48, %s50
      %p54 = scmp.eq.s32.totalorder %s19, 0
      %p55 = por %p53, %p54
      %p56 = scmp.ne.s32.totalorder %s48, %s50
      %p57 = scmp.eq.s32.totalorder %s24, 1
      %p58 = por %p56, %p57
      %p59 = scmp.ne.s32.totalorder %s50, %s51
      %p60 = scmp.eq.s32.totalorder %s24, 0
      %p61 = por %p59, %p60
      %p62 = scmp.ne.s32.totalorder %s50, %s51
      %p63 = scmp.eq.s32.totalorder %s25, 1
      %p64 = por %p62, %p63
      %p66 = scmp.ne.s32.totalorder %s51, %s65
      %p67 = scmp.eq.s32.totalorder %s25, 0
      %p68 = por %p66, %p67
      %s70 = sadd.s32 %s69, 1
      %p73 = scmp.eq.s32.totalorder %s19, 1
      %p74 = scmp.ne.s32.totalorder %s69, %s71
      %p75 = scmp.eq.s32.totalorder %s19, 0
      %p76 = por %p74, %p75
      %p77 = scmp.ne.s32.totalorder %s69, %s71
      %p78 = scmp.eq.s32.totalorder %s24, 1
      %p79 = por %p77, %p78
      %p80 = scmp.ne.s32.totalorder %s71, %s72
      %p81 = scmp.eq.s32.totalorder %s24, 0
      %p82 = por %p80, %p81
      %p83 = scmp.ne.s32.totalorder %s71, %s72
      %p84 = scmp.eq.s32.totalorder %s25, 1
      %p85 = por %p83, %p84
      %p87 = scmp.ne.s32.totalorder %s72, %s86
      %p88 = scmp.eq.s32.totalorder %s25, 0
      %p89 = por %p87, %p88
      %s91 = sadd.s32 %s90, 1
      %p94 = scmp.eq.s32.totalorder %s19, 1
      %p95 = scmp.ne.s32.totalorder %s90, %s92
      %p96 = scmp.eq.s32.totalorder %s19, 0
      %p97 = por %p95, %p96
      %p98 = scmp.ne.s32.totalorder %s90, %s92
      %p99 = scmp.eq.s32.totalorder %s24, 1
      %p100 = por %p98, %p99
      %p101 = scmp.ne.s32.totalorder %s92, %s93
      %p102 = scmp.eq.s32.totalorder %s24, 0
      %p103 = por %p101, %p102
      %p104 = scmp.ne.s32.totalorder %s92, %s93
      %p105 = scmp.eq.s32.totalorder %s25, 1
      %p106 = por %p104, %p105
      %p108 = scmp.ne.s32.totalorder %s93, %s107
      %p109 = scmp.eq.s32.totalorder %s25, 0
      %p110 = por %p108, %p109
      %s111 = ssub.s32 %s19, %s26
      %p112 = scmp.eq.s32.totalorder %s111, 0
      %s114 = sadd.s32 %s113, 1
      %s115 = scalar_select %p112, %s113, %s114
      %p118 = pneg %p112
      %p119 = scmp.eq.s32.totalorder %s19, 1
      %p120 = por %p118, %p119
      %p121 = scmp.ne.s32.totalorder %s113, %s116
      %p122 = scmp.eq.s32.totalorder %s19, 0
      %p123 = por %p121, %p122
      %p124 = scmp.ne.s32.totalorder %s113, %s116
      %p125 = scmp.eq.s32.totalorder %s24, 1
      %p126 = por %p124, %p125
      %p127 = scmp.ne.s32.totalorder %s116, %s117
      %p128 = scmp.eq.s32.totalorder %s24, 0
      %p129 = por %p127, %p128
      %p130 = scmp.ne.s32.totalorder %s116, %s117
      %p131 = scmp.eq.s32.totalorder %s25, 1
      %p132 = por %p130, %p131
      %p134 = scmp.ne.s32.totalorder %s117, %s133
      %p135 = scmp.eq.s32.totalorder %s25, 0
      %p136 = por %p134, %p135
      %s137 = ssub.s32 %s19, %s26
      %p138 = scmp.eq.s32.totalorder %s137, 0
      %s140 = sadd.s32 %s139, 1
      %s141 = scalar_select %p138, %s139, %s140
      %p144 = pneg %p138
      %p145 = scmp.eq.s32.totalorder %s19, 1
      %p146 = por %p144, %p145
      %p147 = scmp.ne.s32.totalorder %s139, %s142
      %p148 = scmp.eq.s32.totalorder %s19, 0
      %p149 = por %p147, %p148
      %p150 = scmp.ne.s32.totalorder %s139, %s142
      %p151 = scmp.eq.s32.totalorder %s24, 1
      %p152 = por %p150, %p151
      %p153 = scmp.ne.s32.totalorder %s142, %s143
      %p154 = scmp.eq.s32.totalorder %s24, 0
      %p155 = por %p153, %p154
      %p156 = scmp.ne.s32.totalorder %s142, %s143
      %p157 = scmp.eq.s32.totalorder %s25, 1
      %p158 = por %p156, %p157
      %p160 = scmp.ne.s32.totalorder %s143, %s159
      %p161 = scmp.eq.s32.totalorder %s25, 0
      %p162 = por %p160, %p161
      %s163 = ssub.s32 %s19, %s26
      %p164 = scmp.eq.s32.totalorder %s163, 0
      %s166 = sadd.s32 %s165, 1
      %s167 = scalar_select %p164, %s165, %s166
      %p170 = pneg %p164
      %p171 = scmp.eq.s32.totalorder %s19, 1
      %p172 = por %p170, %p171
      %p173 = scmp.ne.s32.totalorder %s165, %s168
      %p174 = scmp.eq.s32.totalorder %s19, 0
      %p175 = por %p173, %p174
      %p176 = scmp.ne.s32.totalorder %s165, %s168
      %p177 = scmp.eq.s32.totalorder %s24, 1
      %p178 = por %p176, %p177
      %p179 = scmp.ne.s32.totalorder %s168, %s169
      %p180 = scmp.eq.s32.totalorder %s24, 0
      %p181 = por %p179, %p180
      %p182 = scmp.ne.s32.totalorder %s168, %s169
      %p183 = scmp.eq.s32.totalorder %s25, 1
      %p184 = por %p182, %p183
      %p186 = scmp.ne.s32.totalorder %s169, %s185
      %p187 = scmp.eq.s32.totalorder %s25, 0
      %p188 = por %p186, %p187
      %p189 = scmp.le.s32.totalorder 1, %s19
      %p190 = scmp.lt.s32.totalorder %s19, 3
      %p191 = pnand %p189, %p190
      %p192 = pneg %p191
      // Predicated region
      $region9: #{tpu_custom_call.1} parent=5 // pred_check
        _
      $region10: #{tpu_custom_call.1} parent=5 // pred_check_branch
        %194 = sbr.rel (%p191) target = $region12
      $region11: #{tpu_custom_call.1} parent=5 // pred_region
        %s195 = ssub.s32 %s19, 1
        // Predicated region
        $region13: #{tpu_custom_call.1} parent=11 // pred_check
          %p196 = pneg %p40
        $region14: #{tpu_custom_call.1} parent=11 // pred_check_branch
          %198 = sbr.rel (%p196) target = $region16
        $region15: #{tpu_custom_call.1} parent=11 // pred_region
          _
        $region16: #{tpu_custom_call.1} parent=11 // pred_fallthru
          _
        // Predicated region
        $region17: #{tpu_custom_call.1} parent=11 // pred_check
          %p199 = pneg %p61
        $region18: #{tpu_custom_call.1} parent=11 // pred_check_branch
          %201 = sbr.rel (%p199) target = $region20
        $region19: #{tpu_custom_call.1} parent=11 // pred_region
          _
        $region20: #{tpu_custom_call.1} parent=11 // pred_fallthru
          _
        // Predicated region
        $region21: #{tpu_custom_call.1} parent=11 // pred_check
          %p202 = pneg %p82
        $region22: #{tpu_custom_call.1} parent=11 // pred_check_branch
          %204 = sbr.rel (%p202) target = $region24
        $region23: #{tpu_custom_call.1} parent=11 // pred_region
          %s206 = ssub.s32 8192, 8192
          %207 = vsyncadd [#allocation3], %s206
          %s208 = sshll.u32 [#allocation2], 4
          %s209 = int_to_ptr.vmem [resolvable:$true] %s208
          %214 = dma.hbm_to_vmem [thread:$0]  %s2, 8192, %s209, [#allocation3], 256, 256, 16
        $region24: #{tpu_custom_call.1} parent=11 // pred_fallthru
          _
        // Predicated region
        $region25: #{tpu_custom_call.1} parent=11 // pred_check
          %p215 = pneg %p103
        $region26: #{tpu_custom_call.1} parent=11 // pred_check_branch
          %217 = sbr.rel (%p215) target = $region28
        $region27: #{tpu_custom_call.1} parent=11 // pred_region
          _
        $region28: #{tpu_custom_call.1} parent=11 // pred_fallthru
          _
      $region12: #{tpu_custom_call.1} parent=5 // pred_fallthru
        _
      %p218 = scmp.lt.s32.totalorder %s19, 2
      // Predicated region
      $region29: #{tpu_custom_call.1} parent=5 // pred_check
        %p219 = pneg %p218
      $region30: #{tpu_custom_call.1} parent=5 // pred_check_branch
        %221 = sbr.rel (%p219) target = $region32
      $region31: #{tpu_custom_call.1} parent=5 // pred_region
        // Predicated region
        $region33: #{tpu_custom_call.1} parent=31 // pred_check
          %p222 = pneg %p123
        $region34: #{tpu_custom_call.1} parent=31 // pred_check_branch
          %224 = sbr.rel (%p222) target = $region36
        $region35: #{tpu_custom_call.1} parent=31 // pred_region
          %s225 = sand.u32 %s113, 1
          %s226 = scalar_lea.sflag [#allocation6], %s225
          %s227 = sand.u32 %s113, 1
          %s228 = smul.addr %s227, 256
          %s229 = scalar_lea.vmem [#allocation5], %s228
          %s231 = ssub.s32 4096, 4096
          %232 = vsyncadd %s226, %s231
          %s233 = smul.addr %s19, 128
          %s234 = scalar_lea.hbm %s4, %s233
          %s235 = sshll.u32 %s229, 4
          %s236 = int_to_ptr.vmem [resolvable:$true] %s235
          %241 = dma.hbm_to_vmem [thread:$0]  %s234, 4096, %s236, %s226, 256, 128, 8
        $region36: #{tpu_custom_call.1} parent=31 // pred_fallthru
          _
        // Predicated region
        $region37: #{tpu_custom_call.1} parent=31 // pred_check
          %p242 = pneg %p149
        $region38: #{tpu_custom_call.1} parent=31 // pred_check_branch
          %244 = sbr.rel (%p242) target = $region40
        $region39: #{tpu_custom_call.1} parent=31 // pred_region
          %p245 = scmp.lt.s32.totalorder %s19, 1
          %s246 = scalar_select %p245, %s19, 1
          %s247 = scalar_lea.vmem %s5, %s246
        $region40: #{tpu_custom_call.1} parent=31 // pred_fallthru
          _
      $region32: #{tpu_custom_call.1} parent=5 // pred_fallthru
        _
      %p248 = scmp.le.s32.totalorder 1, %s19
      %p249 = scmp.lt.s32.totalorder %s19, 3
      %p250 = pnand %p248, %p249
      %p251 = pneg %p250
      // Predicated region
      $region41: #{tpu_custom_call.1} parent=5 // pred_check
        _
      $region42: #{tpu_custom_call.1} parent=5 // pred_check_branch
        %253 = sbr.rel (%p250) target = $region44
      $region43: #{tpu_custom_call.1} parent=5 // pred_region
        %s254 = ssub.s32 %s19, 1
        // Predicated region
        $region45: #{tpu_custom_call.1} parent=43 // pred_check
          %p255 = pneg %p82
        $region46: #{tpu_custom_call.1} parent=43 // pred_check_branch
          %257 = sbr.rel (%p255) target = $region48
        $region47: #{tpu_custom_call.1} parent=43 // pred_region
          %258 = dma.done [#allocation3], 8192
        $region48: #{tpu_custom_call.1} parent=43 // pred_fallthru
          _
        %s259 = sand.u32 %s116, 1
        %s260 = scalar_lea.sflag [#allocation6], %s259
        %s261 = sand.u32 %s116, 1
        %s262 = smul.addr %s261, 256
        %s263 = scalar_lea.vmem [#allocation5], %s262
        // Predicated region
        $region49: #{tpu_custom_call.1} parent=43 // pred_check
          %p264 = pneg %p129
        $region50: #{tpu_custom_call.1} parent=43 // pred_check_branch
          %266 = sbr.rel (%p264) target = $region52
        $region51: #{tpu_custom_call.1} parent=43 // pred_region
          %267 = dma.done %s260, 4096
        $region52: #{tpu_custom_call.1} parent=43 // pred_fallthru
          _
        %p268 = pneg %p40
        %p269 = pneg %p37
        %p270 = pneg %p61
        %p271 = pneg %p58
        %p272 = pneg %p82
        %p273 = pneg %p79
        %p274 = pneg %p103
        %p275 = pneg %p100
        %s276 = sand.u32 %s116, 1
        %s277 = scalar_lea.sflag [#allocation6], %s276
        %s278 = sand.u32 %s116, 1
        %s279 = smul.addr %s278, 256
        %s280 = scalar_lea.vmem [#allocation5], %s279
        %p281 = pneg %p129
        %p282 = pneg %p126
        %p283 = scmp.lt.s32.totalorder %s24, 1
        %s284 = scalar_select %p283, %s24, 1
        %s285 = scalar_lea.vmem %s5, %s284
        %p286 = pneg %p155
        %p287 = pneg %p152
        %p288 = pneg %p181
        %p289 = pneg %p178
        %s290 = sand.u32 %s168, 1
        %s291 = scalar_lea.sflag [#allocation4], %s290
        %s292 = sand.u32 %s168, 1
        %s293 = smul.addr %s292, 8
        %s294 = scalar_lea.vmem [#allocation7], %s293
        %p295 = scmp.lt.s32.totalorder %s24, 1
        %s296 = scalar_select %p295, %s24, 1
        %s297 = scalar_lea.vmem %s5, %s296
        %v298 = vld [vmem:[%s0] sm:$0xff]
        %v299 = vld [vmem:[%s1] sm:$0x1]
        %301 = vset.pattern.permute.xlu0 0
        %302 = vperm.xlu0 %301, %v298
        %v303 = vpop.permute.xlu0 %302
        %v306 = vlaneseq
        %v307 = vshrl.u32 %v306, 7
        %v308 = vsub.s32 0, %v307
        %v309 = vrot.slane %v299, %v308
        %v311 = vmul.f32 %v303, %v309
        %v312 = vand.u32 2147483647, %v311
        %vm313 = vcmp.le.f32.partialorder %v312, 0.7853982
        %vm314 = vcmp.lt.s32.totalorder %v311, 0
        %v315 = vand.u32 %v311, 2139095040
        %v316 = vshrl.u32 %v315, 23
        %v317 = vsub.s32 %v316, 127
        %v318 = vand.u32 2147483647, %v311
        %v319 = vand.u32 %v318, 8388607
        %v320 = vor.u32 %v319, 8388608
        %v321 = vsub.s32 0, %v320
        %v322 = vadd.s32 %v317, 1
        %vm323 = vcmp.gt.s32.totalorder %v322, 0
        %v324 = vsel %vm323, %v322, 0
        %v325 = vshrl.u32 %v324, 5
        %v326 = vand.u32 %v324, 31
        %v327 = vsub.s32 32, %v326
        %v328 = vshrl.u32 683565275, %v327
        %v329 = vshll.u32 683565275, %v326
        %v330 = vshrl.u32 2475754826, %v327
        %v331 = vor.u32 %v329, %v330
        %v332 = vshll.u32 2475754826, %v326
        %v333 = vshrl.u32 2131351028, %v327
        %v334 = vor.u32 %v332, %v333
        %v335 = vshll.u32 2131351028, %v326
        %v336 = vshrl.u32 2102212464, %v327
        %v337 = vor.u32 %v335, %v336
        %v338 = vshll.u32 2102212464, %v326
        %v339 = vshrl.u32 920167782, %v327
        %v340 = vor.u32 %v338, %v339
        %v341 = vshll.u32 920167782, %v326
        %v342 = vshrl.u32 1326507024, %v327
        %v343 = vor.u32 %v341, %v342
        %vm344 = vcmp.lt.s32.totalorder %v325, 1
        %vm345 = vcmp.lt.s32.totalorder %v325, 2
        %vm346 = vcmp.lt.s32.totalorder %v325, 3
        %vm347 = vcmp.lt.s32.totalorder %v325, 4
        %v348 = vsel %vm344, %v328, %v331
        %v349 = vsel %vm347, %v337, 2102212464
        %v350 = vsel %vm346, %v334, %v349
        %v351 = vsel %vm345, %v348, %v350
        %v352 = vsel %vm344, %v331, %v334
        %v353 = vsel %vm347, %v340, 920167782
        %v354 = vsel %vm346, %v337, %v353
        %v355 = vsel %vm345, %v352, %v354
        %v356 = vsel %vm344, %v334, %v337
        %v357 = vsel %vm347, %v343, 1326507024
        %v358 = vsel %vm346, %v340, %v357
        %v359 = vsel %vm345, %v356, %v358
        %v360 = vshll.u32 %v320, 8
        %v361 = vmul.u32.u64.compose %v360, %v359
        %v362 = vextract.low.u32 %v361
        %v363 = vextract.high.u32 %v361
        %v364 = vmul.u32.u64.compose %v360, %v355
        %v365 = vextract.low.u32 %v364
        %v366 = vextract.high.u32 %v364
        %v367 = vmul.u32 %v360, %v351
        %v368 = vadd.s32 %v363, %v365
        %vm369 = vc.u32 %v363, %v365
        %v370 = vadd.s32 %v366, 1
        %v371 = vsel %vm369, %v370, %v366
        %v372 = vadd.s32 %v367, %v371
        %v373 = vadd.s32 %v372, 536870912
        %v374 = vshrl.u32 %v373, 30
        %v375 = vshll.u32 %v374, 30
        %v376 = vsub.s32 %v372, %v375
        %vm377 = vcmp.lt.s32.totalorder %v376, 0
        %v378 = vsub.s32 0, %v376
        %v379 = vsel %vm377, %v378, %v376
        %v380 = vclz %v379
        %v381 = vsub.s32 %v380, 2
        %vm382 = vcmp.gt.s32.totalorder 0, %v381
        %v383 = vsel %vm382, 0, %v381
        %v384 = vsub.s32 32, %v383
        %v385 = vshll.u32 %v376, %v383
        %v386 = vshrl.u32 %v368, %v384
        %v387 = vor.u32 %v385, %v386
        %v388 = vsub.s32 4294967266, %v383
        %v389 = vadd.s32 %v388, 127
        %v390 = vshll.u32 %v389, 23
        %v391 = vor.u32 4788187, %v390
        %v392 = vand.u32 2147483647, %v391
        %v394 = vcvt.s32.f32 %v387
        %v395 = vmul.f32 %v394, %v392
        %v396 = vxor.u32 %v395, 2147483648
        %v397 = vsel %vm314, %v396, %v395
        %v398 = vsub.s32 4, %v374
        %v399 = vsel %vm314, %v398, %v374
        %v400 = vsel %vm313, %v311, %v397
        %v401 = vsel %vm313, 0, %v399
        %v402 = vcosq.f32.pop %v400
        %v403 = vsinq.f32.pop %v400
        %vm404 = vweird.f32 %v311
        %v405 = vand.u32 %v401, 3
        %vm406 = vcmp.lt.s32.totalorder %v405, 2
        %vm407 = vcmp.eq.s32.totalorder %v405, 0
        %v408 = vxor.u32 %v403, 2147483648
        %v409 = vsel %vm407, %v402, %v408
        %vm410 = vcmp.eq.s32.totalorder %v405, 2
        %v411 = vxor.u32 %v402, 2147483648
        %v412 = vsel %vm410, %v411, %v403
        %v413 = vsel %vm406, %v409, %v412
        %v414 = vsel %vm404, nan, %v413
        %v415 = vand.u32 2147483647, %v311
        %vm416 = vcmp.le.f32.partialorder %v415, 0.7853982
        %vm417 = vcmp.lt.s32.totalorder %v311, 0
        %v418 = vand.u32 %v311, 2139095040
        %v419 = vshrl.u32 %v418, 23
        %v420 = vsub.s32 %v419, 127
        %v421 = vand.u32 2147483647, %v311
        %v422 = vand.u32 %v421, 8388607
        %v423 = vor.u32 %v422, 8388608
        %v424 = vsub.s32 0, %v423
        %v425 = vadd.s32 %v420, 1
        %vm426 = vcmp.gt.s32.totalorder %v425, 0
        %v427 = vsel %vm426, %v425, 0
        %v428 = vshrl.u32 %v427, 5
        %v429 = vand.u32 %v427, 31
        %v430 = vsub.s32 32, %v429
        %v431 = vshrl.u32 683565275, %v430
        %v432 = vshll.u32 683565275, %v429
        %v433 = vshrl.u32 2475754826, %v430
        %v434 = vor.u32 %v432, %v433
        %v435 = vshll.u32 2475754826, %v429
        %v436 = vshrl.u32 2131351028, %v430
        %v437 = vor.u32 %v435, %v436
        %v438 = vshll.u32 2131351028, %v429
        %v439 = vshrl.u32 2102212464, %v430
        %v440 = vor.u32 %v438, %v439
        %v441 = vshll.u32 2102212464, %v429
        %v442 = vshrl.u32 920167782, %v430
        %v443 = vor.u32 %v441, %v442
        %v444 = vshll.u32 920167782, %v429
        %v445 = vshrl.u32 1326507024, %v430
        %v446 = vor.u32 %v444, %v445
        %vm447 = vcmp.lt.s32.totalorder %v428, 1
        %vm448 = vcmp.lt.s32.totalorder %v428, 2
        %vm449 = vcmp.lt.s32.totalorder %v428, 3
        %vm450 = vcmp.lt.s32.totalorder %v428, 4
        %v451 = vsel %vm447, %v431, %v434
        %v452 = vsel %vm450, %v440, 2102212464
        %v453 = vsel %vm449, %v437, %v452
        %v454 = vsel %vm448, %v451, %v453
        %v455 = vsel %vm447, %v434, %v437
        %v456 = vsel %vm450, %v443, 920167782
        %v457 = vsel %vm449, %v440, %v456
        %v458 = vsel %vm448, %v455, %v457
        %v459 = vsel %vm447, %v437, %v440
        %v460 = vsel %vm450, %v446, 1326507024
        %v461 = vsel %vm449, %v443, %v460
        %v462 = vsel %vm448, %v459, %v461
        %v463 = vshll.u32 %v423, 8
        %v464 = vmul.u32.u64.compose %v463, %v462
        %v465 = vextract.low.u32 %v464
        %v466 = vextract.high.u32 %v464
        %v467 = vmul.u32.u64.compose %v463, %v458
        %v468 = vextract.low.u32 %v467
        %v469 = vextract.high.u32 %v467
        %v470 = vmul.u32 %v463, %v454
        %v471 = vadd.s32 %v466, %v468
        %vm472 = vc.u32 %v466, %v468
        %v473 = vadd.s32 %v469, 1
        %v474 = vsel %vm472, %v473, %v469
        %v475 = vadd.s32 %v470, %v474
        %v476 = vadd.s32 %v475, 536870912
        %v477 = vshrl.u32 %v476, 30
        %v478 = vshll.u32 %v477, 30
        %v479 = vsub.s32 %v475, %v478
        %vm480 = vcmp.lt.s32.totalorder %v479, 0
        %v481 = vsub.s32 0, %v479
        %v482 = vsel %vm480, %v481, %v479
        %v483 = vclz %v482
        %v484 = vsub.s32 %v483, 2
        %vm485 = vcmp.gt.s32.totalorder 0, %v484
        %v486 = vsel %vm485, 0, %v484
        %v487 = vsub.s32 32, %v486
        %v488 = vshll.u32 %v479, %v486
        %v489 = vshrl.u32 %v471, %v487
        %v490 = vor.u32 %v488, %v489
        %v491 = vsub.s32 4294967266, %v486
        %v492 = vadd.s32 %v491, 127
        %v493 = vshll.u32 %v492, 23
        %v494 = vor.u32 4788187, %v493
        %v495 = vand.u32 2147483647, %v494
        %v497 = vcvt.s32.f32 %v490
        %v498 = vmul.f32 %v497, %v495
        %v499 = vxor.u32 %v498, 2147483648
        %v500 = vsel %vm417, %v499, %v498
        %v501 = vsub.s32 4, %v477
        %v502 = vsel %vm417, %v501, %v477
        %v503 = vsel %vm416, %v311, %v500
        %v504 = vsel %vm416, 0, %v502
        %v505 = vcosq.f32.pop %v503
        %v506 = vsinq.f32.pop %v503
        %vm507 = vweird.f32 %v311
        %v508 = vadd.s32 %v504, 3
        %v509 = vand.u32 %v508, 3
        %vm510 = vcmp.lt.s32.totalorder %v509, 2
        %vm511 = vcmp.eq.s32.totalorder %v509, 0
        %v512 = vxor.u32 %v506, 2147483648
        %v513 = vsel %vm511, %v505, %v512
        %vm514 = vcmp.eq.s32.totalorder %v509, 2
        %v515 = vxor.u32 %v505, 2147483648
        %v516 = vsel %vm514, %v515, %v506
        %v517 = vsel %vm510, %v513, %v516
        %v518 = vsel %vm507, nan, %v517
        %v519 = vld [vmem:[#allocation2] sm:$0xff]
        %v520 = vld [vmem:[#allocation2 + $0x8] sm:$0xff]
        %v521 = vld [vmem:[#allocation2 + $0x10] sm:$0xff]
        %v522 = vld [vmem:[#allocation2 + $0x18] sm:$0xff]
        %v523 = vld [vmem:[#allocation2 + $0x20] sm:$0xff]
        %v524 = vld [vmem:[#allocation2 + $0x28] sm:$0xff]
        %v525 = vld [vmem:[#allocation2 + $0x30] sm:$0xff]
        %v526 = vld [vmem:[#allocation2 + $0x38] sm:$0xff]
        %v527 = vld [vmem:[#allocation2 + $0x40] sm:$0xff]
        %v528 = vld [vmem:[#allocation2 + $0x48] sm:$0xff]
        %v529 = vld [vmem:[#allocation2 + $0x50] sm:$0xff]
        %v530 = vld [vmem:[#allocation2 + $0x58] sm:$0xff]
        %v531 = vld [vmem:[#allocation2 + $0x60] sm:$0xff]
        %v532 = vld [vmem:[#allocation2 + $0x68] sm:$0xff]
        %v533 = vld [vmem:[#allocation2 + $0x70] sm:$0xff]
        %v534 = vld [vmem:[#allocation2 + $0x78] sm:$0xff]
        %v535 = vld [vmem:[#allocation2 + $0x80] sm:$0xff]
        %v536 = vld [vmem:[#allocation2 + $0x88] sm:$0xff]
        %v537 = vld [vmem:[#allocation2 + $0x90] sm:$0xff]
        %v538 = vld [vmem:[#allocation2 + $0x98] sm:$0xff]
        %v539 = vld [vmem:[#allocation2 + $0xa0] sm:$0xff]
        %v540 = vld [vmem:[#allocation2 + $0xa8] sm:$0xff]
        %v541 = vld [vmem:[#allocation2 + $0xb0] sm:$0xff]
        %v542 = vld [vmem:[#allocation2 + $0xb8] sm:$0xff]
        %v543 = vld [vmem:[#allocation2 + $0xc0] sm:$0xff]
        %v544 = vld [vmem:[#allocation2 + $0xc8] sm:$0xff]
        %v545 = vld [vmem:[#allocation2 + $0xd0] sm:$0xff]
        %v546 = vld [vmem:[#allocation2 + $0xd8] sm:$0xff]
        %v547 = vld [vmem:[#allocation2 + $0xe0] sm:$0xff]
        %v548 = vld [vmem:[#allocation2 + $0xe8] sm:$0xff]
        %v549 = vld [vmem:[#allocation2 + $0xf0] sm:$0xff]
        %v550 = vld [vmem:[#allocation2 + $0xf8] sm:$0xff]
        %v551 = vld [vmem:[#allocation2 + $0x100] sm:$0xff]
        %v552 = vld [vmem:[#allocation2 + $0x108] sm:$0xff]
        %v553 = vld [vmem:[#allocation2 + $0x110] sm:$0xff]
        %v554 = vld [vmem:[#allocation2 + $0x118] sm:$0xff]
        %v555 = vld [vmem:[#allocation2 + $0x120] sm:$0xff]
        %v556 = vld [vmem:[#allocation2 + $0x128] sm:$0xff]
        %v557 = vld [vmem:[#allocation2 + $0x130] sm:$0xff]
        %v558 = vld [vmem:[#allocation2 + $0x138] sm:$0xff]
        %v559 = vld [vmem:[#allocation2 + $0x140] sm:$0xff]
        %v560 = vld [vmem:[#allocation2 + $0x148] sm:$0xff]
        %v561 = vld [vmem:[#allocation2 + $0x150] sm:$0xff]
        %v562 = vld [vmem:[#allocation2 + $0x158] sm:$0xff]
        %v563 = vld [vmem:[#allocation2 + $0x160] sm:$0xff]
        %v564 = vld [vmem:[#allocation2 + $0x168] sm:$0xff]
        %v565 = vld [vmem:[#allocation2 + $0x170] sm:$0xff]
        %v566 = vld [vmem:[#allocation2 + $0x178] sm:$0xff]
        %v567 = vld [vmem:[#allocation2 + $0x180] sm:$0xff]
        %v568 = vld [vmem:[#allocation2 + $0x188] sm:$0xff]
        %v569 = vld [vmem:[#allocation2 + $0x190] sm:$0xff]
        %v570 = vld [vmem:[#allocation2 + $0x198] sm:$0xff]
        %v571 = vld [vmem:[#allocation2 + $0x1a0] sm:$0xff]
        %v572 = vld [vmem:[#allocation2 + $0x1a8] sm:$0xff]
        %v573 = vld [vmem:[#allocation2 + $0x1b0] sm:$0xff]
        %v574 = vld [vmem:[#allocation2 + $0x1b8] sm:$0xff]
        %v575 = vld [vmem:[#allocation2 + $0x1c0] sm:$0xff]
        %v576 = vld [vmem:[#allocation2 + $0x1c8] sm:$0xff]
        %v577 = vld [vmem:[#allocation2 + $0x1d0] sm:$0xff]
        %v578 = vld [vmem:[#allocation2 + $0x1d8] sm:$0xff]
        %v579 = vld [vmem:[#allocation2 + $0x1e0] sm:$0xff]
        %v580 = vld [vmem:[#allocation2 + $0x1e8] sm:$0xff]
        %v581 = vld [vmem:[#allocation2 + $0x1f0] sm:$0xff]
        %v582 = vld [vmem:[#allocation2 + $0x1f8] sm:$0xff]
        %v583 = vld [vmem:[%s3] sm:$0x3]
        %v585 = vlaneseq
        %v586 = vshrl.u32 %v585, 7
        %v587 = vsub.s32 0, %v586
        %v588 = vrot.slane %v583, %v587
        %v589 = vlaneseq
        %v590 = vshrl.u32 %v589, 7
        %v591 = vsub.s32 1, %v590
        %v592 = vrot.slane %v583, %v591
        %595 = vmatprep.subr.mxu0 %v520
        %596 = vmatpush1.msra.mxu0 %v519
        %597 = vmatprep.subr.mxu0 %v522
        %598 = vmatpush1.msra.mxu0 %v521
        %599 = vmatprep.subr.mxu0 %v524
        %600 = vmatpush1.msra.mxu0 %v523
        %601 = vmatprep.subr.mxu0 %v526
        %602 = vmatpush1.msra.mxu0 %v525
        %603 = vmatprep.subr.mxu0 %v528
        %604 = vmatpush1.msra.mxu0 %v527
        %605 = vmatprep.subr.mxu0 %v530
        %606 = vmatpush1.msra.mxu0 %v529
        %607 = vmatprep.subr.mxu0 %v532
        %608 = vmatpush1.msra.mxu0 %v531
        %609 = vmatprep.subr.mxu0 %v534
        %610 = vmatpush1.msra.mxu0 %v533
        %611 = vmatprep.subr.mxu0 %v536
        %612 = vmatpush1.msra.mxu0 %v535
        %613 = vmatprep.subr.mxu0 %v538
        %614 = vmatpush1.msra.mxu0 %v537
        %615 = vmatprep.subr.mxu0 %v540
        %616 = vmatpush1.msra.mxu0 %v539
        %617 = vmatprep.subr.mxu0 %v542
        %618 = vmatpush1.msra.mxu0 %v541
        %619 = vmatprep.subr.mxu0 %v544
        %620 = vmatpush1.msra.mxu0 %v543
        %621 = vmatprep.subr.mxu0 %v546
        %622 = vmatpush1.msra.mxu0 %v545
        %623 = vmatprep.subr.mxu0 %v548
        %624 = vmatpush1.msra.mxu0 %v547
        %625 = vmatprep.subr.mxu0 %v550
        %626 = vmatpush1.msra.mxu0 %v549
        %627 = vmatprep.subr.mxu0 %v552
        %628 = vmatpush1.msra.mxu0 %v551
        %629 = vmatprep.subr.mxu0 %v554
        %630 = vmatpush1.msra.mxu0 %v553
        %631 = vmatprep.subr.mxu0 %v556
        %632 = vmatpush1.msra.mxu0 %v555
        %633 = vmatprep.subr.mxu0 %v558
        %634 = vmatpush1.msra.mxu0 %v557
        %635 = vmatprep.subr.mxu0 %v560
        %636 = vmatpush1.msra.mxu0 %v559
        %637 = vmatprep.subr.mxu0 %v562
        %638 = vmatpush1.msra.mxu0 %v561
        %639 = vmatprep.subr.mxu0 %v564
        %640 = vmatpush1.msra.mxu0 %v563
        %641 = vmatprep.subr.mxu0 %v566
        %642 = vmatpush1.msra.mxu0 %v565
        %643 = vmatprep.subr.mxu0 %v568
        %644 = vmatpush1.msra.mxu0 %v567
        %645 = vmatprep.subr.mxu0 %v570
        %646 = vmatpush1.msra.mxu0 %v569
        %647 = vmatprep.subr.mxu0 %v572
        %648 = vmatpush1.msra.mxu0 %v571
        %649 = vmatprep.subr.mxu0 %v574
        %650 = vmatpush1.msra.mxu0 %v573
        %651 = vmatprep.subr.mxu0 %v576
        %652 = vmatpush1.msra.mxu0 %v575
        %653 = vmatprep.subr.mxu0 %v578
        %654 = vmatpush1.msra.mxu0 %v577
        %655 = vmatprep.subr.mxu0 %v580
        %656 = vmatpush1.msra.mxu0 %v579
        %657 = vmatprep.subr.mxu0 %v582
        %658 = vmatpush1.msra.mxu0 %v581
        %659 = vmatprep.mubr.f32.mxu0 %v518
        %660 = vmatmul.mubr.f32.gmra.mrb[0].mxu0 %v414
        %v661 = vpop.f32.mrb[0].mxu0
        %v662 = vadd.f32 %v588, %v661
        %v663 = vpop.f32.mrb[0].mxu0
        %v664 = vadd.f32 %v592, %v663
        %665 = vdwg.mxu0
        %v666 = vxor.u32 %v662, 2147483648
        %v667 = vxor.u32 %v664, 2147483648
        %v668 = vmul.f32 %v666, 1.442695
        %v669 = vpow.pop %v668
        %v670 = vmul.f32 %v667, 1.442695
        %v671 = vpow.pop %v670
        %v672 = vadd.f32 %v669, 1.0
        %v673 = vadd.f32 %v671, 1.0
        %v674 = vrcp.pop %v672
        %v675 = vmul.f32 1.0, %v674
        %v676 = vrcp.pop %v673
        %v677 = vmul.f32 1.0, %v676
        %v678 = vmul.f32 %v662, %v675
        %v679 = vmul.f32 %v664, %v677
        %v680 = vld [vmem:[%s263] sm:$0xff]
        %v681 = vld [vmem:[%s263 + $0x8] sm:$0xff]
        %v682 = vld [vmem:[%s263 + $0x10] sm:$0xff]
        %v683 = vld [vmem:[%s263 + $0x18] sm:$0xff]
        %v684 = vld [vmem:[%s263 + $0x20] sm:$0xff]
        %v685 = vld [vmem:[%s263 + $0x28] sm:$0xff]
        %v686 = vld [vmem:[%s263 + $0x30] sm:$0xff]
        %v687 = vld [vmem:[%s263 + $0x38] sm:$0xff]
        %v688 = vld [vmem:[%s263 + $0x40] sm:$0xff]
        %v689 = vld [vmem:[%s263 + $0x48] sm:$0xff]
        %v690 = vld [vmem:[%s263 + $0x50] sm:$0xff]
        %v691 = vld [vmem:[%s263 + $0x58] sm:$0xff]
        %v692 = vld [vmem:[%s263 + $0x60] sm:$0xff]
        %v693 = vld [vmem:[%s263 + $0x68] sm:$0xff]
        %v694 = vld [vmem:[%s263 + $0x70] sm:$0xff]
        %v695 = vld [vmem:[%s263 + $0x78] sm:$0xff]
        %v696 = vld [vmem:[%s263 + $0x80] sm:$0xff]
        %v697 = vld [vmem:[%s263 + $0x88] sm:$0xff]
        %v698 = vld [vmem:[%s263 + $0x90] sm:$0xff]
        %v699 = vld [vmem:[%s263 + $0x98] sm:$0xff]
        %v700 = vld [vmem:[%s263 + $0xa0] sm:$0xff]
        %v701 = vld [vmem:[%s263 + $0xa8] sm:$0xff]
        %v702 = vld [vmem:[%s263 + $0xb0] sm:$0xff]
        %v703 = vld [vmem:[%s263 + $0xb8] sm:$0xff]
        %v704 = vld [vmem:[%s263 + $0xc0] sm:$0xff]
        %v705 = vld [vmem:[%s263 + $0xc8] sm:$0xff]
        %v706 = vld [vmem:[%s263 + $0xd0] sm:$0xff]
        %v707 = vld [vmem:[%s263 + $0xd8] sm:$0xff]
        %v708 = vld [vmem:[%s263 + $0xe0] sm:$0xff]
        %v709 = vld [vmem:[%s263 + $0xe8] sm:$0xff]
        %v710 = vld [vmem:[%s263 + $0xf0] sm:$0xff]
        %v711 = vld [vmem:[%s263 + $0xf8] sm:$0xff]
        %v712 = vld [vmem:[%s297] sm:$0x1]
        %v714 = vlaneseq
        %v715 = vshrl.u32 %v714, 7
        %v716 = vsub.s32 0, %v715
        %v717 = vrot.slane %v712, %v716
        %719 = vmatprep.subr.mxu0 0.0
        %720 = vmatpush1.msra.mxu0 %v680
        %721 = vmatprep.subr.mxu0 0.0
        %722 = vmatpush1.msra.mxu0 %v681
        %723 = vmatprep.subr.mxu0 0.0
        %724 = vmatpush1.msra.mxu0 %v682
        %725 = vmatprep.subr.mxu0 0.0
        %726 = vmatpush1.msra.mxu0 %v683
        %727 = vmatprep.subr.mxu0 0.0
        %728 = vmatpush1.msra.mxu0 %v684
        %729 = vmatprep.subr.mxu0 0.0
        %730 = vmatpush1.msra.mxu0 %v685
        %731 = vmatprep.subr.mxu0 0.0
        %732 = vmatpush1.msra.mxu0 %v686
        %733 = vmatprep.subr.mxu0 0.0
        %734 = vmatpush1.msra.mxu0 %v687
        %735 = vmatprep.subr.mxu0 0.0
        %736 = vmatpush1.msra.mxu0 %v688
        %737 = vmatprep.subr.mxu0 0.0
        %738 = vmatpush1.msra.mxu0 %v689
        %739 = vmatprep.subr.mxu0 0.0
        %740 = vmatpush1.msra.mxu0 %v690
        %741 = vmatprep.subr.mxu0 0.0
        %742 = vmatpush1.msra.mxu0 %v691
        %743 = vmatprep.subr.mxu0 0.0
        %744 = vmatpush1.msra.mxu0 %v692
        %745 = vmatprep.subr.mxu0 0.0
        %746 = vmatpush1.msra.mxu0 %v693
        %747 = vmatprep.subr.mxu0 0.0
        %748 = vmatpush1.msra.mxu0 %v694
        %749 = vmatprep.subr.mxu0 0.0
        %750 = vmatpush1.msra.mxu0 %v695
        %751 = vmatprep.subr.mxu0 0.0
        %752 = vmatpush1.msra.mxu0 %v696
        %753 = vmatprep.subr.mxu0 0.0
        %754 = vmatpush1.msra.mxu0 %v697
        %755 = vmatprep.subr.mxu0 0.0
        %756 = vmatpush1.msra.mxu0 %v698
        %757 = vmatprep.subr.mxu0 0.0
        %758 = vmatpush1.msra.mxu0 %v699
        %759 = vmatprep.subr.mxu0 0.0
        %760 = vmatpush1.msra.mxu0 %v700
        %761 = vmatprep.subr.mxu0 0.0
        %762 = vmatpush1.msra.mxu0 %v701
        %763 = vmatprep.subr.mxu0 0.0
        %764 = vmatpush1.msra.mxu0 %v702
        %765 = vmatprep.subr.mxu0 0.0
        %766 = vmatpush1.msra.mxu0 %v703
        %767 = vmatprep.subr.mxu0 0.0
        %768 = vmatpush1.msra.mxu0 %v704
        %769 = vmatprep.subr.mxu0 0.0
        %770 = vmatpush1.msra.mxu0 %v705
        %771 = vmatprep.subr.mxu0 0.0
        %772 = vmatpush1.msra.mxu0 %v706
        %773 = vmatprep.subr.mxu0 0.0
        %774 = vmatpush1.msra.mxu0 %v707
        %775 = vmatprep.subr.mxu0 0.0
        %776 = vmatpush1.msra.mxu0 %v708
        %777 = vmatprep.subr.mxu0 0.0
        %778 = vmatpush1.msra.mxu0 %v709
        %779 = vmatprep.subr.mxu0 0.0
        %780 = vmatpush1.msra.mxu0 %v710
        %781 = vmatprep.subr.mxu0 0.0
        %782 = vmatpush1.msra.mxu0 %v711
        %783 = vmatprep.mubr.f32.mxu0 %v679
        %784 = vmatmul.mubr.f32.gmra.mrb[0].mxu0 %v678
        %v785 = vpop.f32.mrb[0].mxu0
        %v786 = vadd.f32 %v717, %v785
        %v787 = vpop.f32.mrb[0].mxu0
        %788 = vdwg.mxu0
        %789 = vst [vmem:[%s294] sm:$0xff] %v786
        %s790 = sand.u32 %s168, 1
        %s791 = scalar_lea.sflag [#allocation4], %s790
        %s792 = sand.u32 %s168, 1
        %s793 = smul.addr %s792, 8
        %s794 = scalar_lea.vmem [#allocation7], %s793
        // Predicated region
        $region53: #{tpu_custom_call.1} parent=43 // pred_check
          %p795 = pneg %p178
        $region54: #{tpu_custom_call.1} parent=43 // pred_check_branch
          %797 = sbr.rel (%p795) target = $region56
        $region55: #{tpu_custom_call.1} parent=43 // pred_region
          %s799 = ssub.s32 128, 128
          %800 = vsyncadd %s791, %s799
          %s801 = smul.addr %s24, 128
          %s802 = scalar_lea.hbm %s6, %s801
          %s804 = sshll.u32 %s794, 4
          %s805 = int_to_ptr.vmem [resolvable:$true] %s804
          %807 = dma.vmem_to_hbm [thread:$0]  %s805, 128, %s802, %s791
        $region56: #{tpu_custom_call.1} parent=43 // pred_fallthru
          _
      $region44: #{tpu_custom_call.1} parent=5 // pred_fallthru
        _
      %p808 = scmp.le.s32.totalorder 2, %s19
      // Predicated region
      $region57: #{tpu_custom_call.1} parent=5 // pred_check
        %p809 = pneg %p808
      $region58: #{tpu_custom_call.1} parent=5 // pred_check_branch
        %811 = sbr.rel (%p809) target = $region60
      $region59: #{tpu_custom_call.1} parent=5 // pred_region
        %s812 = ssub.s32 %s19, 2
        // Predicated region
        $region61: #{tpu_custom_call.1} parent=59 // pred_check
          %p813 = pneg %p184
        $region62: #{tpu_custom_call.1} parent=59 // pred_check_branch
          %815 = sbr.rel (%p813) target = $region64
        $region63: #{tpu_custom_call.1} parent=59 // pred_region
          %s816 = sand.u32 %s169, 1
          %s817 = scalar_lea.sflag [#allocation4], %s816
          %s818 = sand.u32 %s169, 1
          %s819 = smul.addr %s818, 8
          %s820 = scalar_lea.vmem [#allocation7], %s819
          %821 = dma.done %s817, 128
        $region64: #{tpu_custom_call.1} parent=59 // pred_fallthru
          _
      $region60: #{tpu_custom_call.1} parent=5 // pred_fallthru
        _
    $region6: #{tpu_custom_call.1} parent=1 // loop_footer
      %s23 = sadd.s32 1, %s19
    $region7: #{tpu_custom_call.1} parent=1 // loop_footer_branch
      %18 = sbr.rel target = $region3
    $region8: #{tpu_custom_call.1} parent=1 // loop_exit
      _
    %822 = vsyncpa [#allocation3], 1
    %s823 = scalar_lea.sflag [#allocation3], 1
    %824 = vsyncpa %s823, 1
    %825 = vsyncpa [#allocation6], 1
    %s826 = scalar_lea.sflag [#allocation6], 1
    %827 = vsyncpa %s826, 1
    %828 = vsyncpa [#allocation4], 1
    %s829 = scalar_lea.sflag [#allocation4], 1
    %830 = vsyncpa %s829, 1

</llo_original>
